<compile_context>
chip_gen: v7x
topology: tpu7x:2x2x1
jax: 0.10.0
libtpu: 0.0.40
codegen_flags: <defaults>
</compile_context>

<pallas_src>
import jax
import jax.numpy as jnp
from jax import lax
from jax.experimental import pallas as pl
from jax.experimental.pallas import tpu as pltpu


def _round_up(x, m):
    return -(-x // m) * m


def _focal_pow(one_minus_p, gamma):
    """(1 - p)**gamma for a compile-time-constant gamma."""
    g = float(gamma)
    if g == 0.0:
        return jnp.ones_like(one_minus_p)
    if g.is_integer():
        return lax.integer_pow(one_minus_p, int(g))
    # Non-integer gamma: clamp to avoid pow(neg, frac) from rounding noise.
    return jnp.power(jnp.maximum(one_minus_p, 0.0), g)


def focal_loss_2d(inputs, targets, gamma=2, weight=None, tile_lanes=None):
    """Pallas equivalent of FocalLoss2d.forward.

    Args:
      inputs:  (N, C, H, W) float logits (NCHW, like PyTorch).
      targets: (N, H, W)    integer class indices in [0, C).
      gamma:   focusing parameter (compile-time constant).
      weight:  optional (C,) per-class rescaling weight (NLLLoss weight).
      tile_lanes: optional override of the HW tile size (testing knob).
    Returns:
      scalar float32 loss.
    """
    N, C, H, W = inputs.shape
    HW = H * W
    itemsize = jnp.dtype(inputs.dtype).itemsize

    # Smallest integer dtype that holds the class ids: shrinks the target
    # stream 4x (vs int32) on this memory-bound kernel when C <= 127.
    if C <= 127:
        t_dtype = jnp.int8
    elif C <= 32767:
        t_dtype = jnp.int16
    else:
        t_dtype = jnp.int32
    t_itemsize = jnp.dtype(t_dtype).itemsize

    weighted = weight is not None
    n_acc = 2 if weighted else 1

    # ---- HW tile size from a per-generation VMEM budget --------------------
    try:
        vmem_cap = int(pltpu.get_tpu_info().vmem_capacity_bytes)
    except Exception:
        vmem_cap = 64 * 1024 * 1024  # conservative fallback: v7x per-TC VMEM
    # Leave generous headroom for Mosaic internal scratch; strictest on the
    # 64 MiB parts (v7x).
    budget = min(int(vmem_cap * 0.55), 48 * 1024 * 1024)

    # Per-lane VMEM: double-buffered x & t input blocks + f32 accumulator
    # outputs (counted double-buffered, conservatively).
    bytes_per_lane = 2 * (C * itemsize + t_itemsize) + 2 * 4 * n_acc

    if tile_lanes is not None:
        t_cap = max(128, (int(tile_lanes) // 128) * 128)
    else:
        t_cap = max(128, (budget // bytes_per_lane) // 128 * 128)
        t_cap = min(t_cap, 256 * 1024)  # amortization saturates well before this
        if N == 1:
            # Keep >= 2 HW blocks so the per-core HW split can feed both
            # v7x TensorCores even when the batch axis cannot.
            t_cap = min(t_cap, max(128, _round_up(-(-HW // 2), 128)))

    if HW <= t_cap:
        T = HW          # full extent; need not be a lane multiple
        n_hw = 1
    else:
        T = t_cap       # multiple of 128; ragged last tile masked in-kernel
        n_hw = -(-HW // T)

    # HW core-split (only when N cannot provide megacore parallelism).  Core
    # chunk 0 owns element range [0, split), chunk 1 owns [split, HW); when
    # n_hw is odd the chunks share one boundary block whose lanes are
    # partitioned by the validity mask (no double counting, no OOB block).
    hw_chunks = 2 if (N == 1 and n_hw >= 2) else 1
    n_hw_half = (n_hw + 1) // 2 if hw_chunks == 2 else n_hw
    core1_first = n_hw - n_hw_half        # first block index of chunk 1
    split = n_hw_half * T                 # element boundary between chunks
    upper0 = min(split, HW)

    x3 = inputs.reshape(N, C, HW)                        # keep storage dtype
    t3 = targets.reshape(N, 1, HW).astype(t_dtype)
    args = [x3, t3]
    if weighted:
        args.append(jnp.asarray(weight, dtype=jnp.float32).reshape(C, 1))

    def kernel(*refs):
        if weighted:
            x_ref, t_ref, w_ref, num_ref, den_ref = refs
        else:
            x_ref, t_ref, num_ref = refs

        core = pl.program_id(1)
        h = pl.program_id(2)

        @pl.when(h == 0)
        def _():
            num_ref[...] = jnp.zeros_like(num_ref)
            if weighted:
                den_ref[...] = jnp.zeros_like(den_ref)

        x = x_ref[0].astype(jnp.float32)                  # (C, T)
        t = t_ref[0].astype(jnp.int32)                    # (1, T)

        c_ids = lax.broadcasted_iota(jnp.int32, (C, T), 0)
        onehot = (c_ids == t).astype(jnp.float32)         # one-hot over channels

        # Numerically stable channel-softmax reductions (C on sublanes).
        m = jnp.max(x, axis=0, keepdims=True)             # (1, T)
        e = jnp.exp(x - m)                                # (C, T)
        s = jnp.sum(e, axis=0, keepdims=True)             # (1, T)

        x_t = jnp.sum(onehot * x, axis=0, keepdims=True)  # logit at target
        e_t = jnp.sum(onehot * e, axis=0, keepdims=True)  # exp(x_t - m), reused

        logp_t = (x_t - m) - jnp.log(s)                   # log_softmax at target
        # p_t from the already-computed e (drops T extra EUP exps).  Exact
        # (non-approx) reciprocal: approx=True (~2^-12) would cost accuracy.
        p_t = e_t * pl.reciprocal(s)
        focal = _focal_pow(1.0 - p_t, gamma)              # (1 - p_t)^gamma

        picked = focal * (-logp_t)                        # (1, T)
        if weighted:
            w = w_ref[...].astype(jnp.float32)            # (C, 1)
            w_t = jnp.sum(onehot * w, axis=0, keepdims=True)
            picked = picked * w_t

        # Lane-validity mask.  It (a) discards the ragged tail of the last HW
        # tile, whose x/t hold stale VMEM bytes so exp/log may be inf/NaN --
        # jnp.where does NOT propagate NaN from the unselected branch, so mask
        # *after* computing and never sum before masking -- and (b) keeps the
        # two per-core HW chunks disjoint (no pixel counted twice when n_hw is
        # odd).  Out-of-range targets contribute 0 (onehot all-zero).
        block_idx = core * core1_first + h
        lane = lax.broadcasted_iota(jnp.int32, (1, T), 1)
        elem = block_idx * T + lane
        lower = core * split
        upper = jnp.where(core == 0, upper0, HW)
        valid = (elem >= lower) & (elem < upper)

        num_ref[...] += jnp.where(valid, picked, 0.0)[None]
        if weighted:
            den_ref[...] += jnp.where(valid, w_t, 0.0)[None]

    x_spec = pl.BlockSpec((1, C, T), lambda n, c, h: (n, 0, c * core1_first + h))
    t_spec = pl.BlockSpec((1, 1, T), lambda n, c, h: (n, 0, c * core1_first + h))
    acc_spec = pl.BlockSpec((1, 1, T), lambda n, c, h: (n, c, 0))

    in_specs = [x_spec, t_spec]
    out_specs = [acc_spec]
    out_shape = [jax.ShapeDtypeStruct((N, hw_chunks, T), jnp.float32)]
    if weighted:
        in_specs.append(pl.BlockSpec((C, 1), lambda n, c, h: (0, 0)))
        out_specs.append(acc_spec)
        out_shape.append(jax.ShapeDtypeStruct((N, hw_chunks, T), jnp.float32))

    # Explicit VMEM requirement: double-buffered input blocks + accumulator
    # output buffers (+ tiny weight block) + slack.  By construction of T this
    # stays well below 64 MiB on v7x and leaves headroom for Mosaic scratch.
    vmem_need = (2 * T * (C * itemsize + t_itemsize)
                 + 2 * n_acc * T * 4
                 + (2 * C * 4 if weighted else 0))
    vmem_limit = int(max(16 * 1024 * 1024, vmem_need + 4 * 1024 * 1024))

    outs = pl.pallas_call(
        kernel,
        out_shape=tuple(out_shape),
        grid_spec=pltpu.PrefetchScalarGridSpec(
            num_scalar_prefetch=0,
            grid=(N, hw_chunks, n_hw_half),
            in_specs=in_specs,
            out_specs=tuple(out_specs),
        ),
        compiler_params=pltpu.CompilerParams(
            dimension_semantics=("parallel", "parallel", "arbitrary"),
            vmem_limit_bytes=vmem_limit,
        ),
    )(*args)

    if weighted:
        num, den = outs
        return jnp.sum(num) / jnp.sum(den)
    # NLLLoss 'mean' with no weight divides by the element count N*H*W.
    (num,) = outs
    return jnp.sum(num) / jnp.float32(N * HW)


def _reference(inputs, targets, gamma=2, weight=None):
    """Pure-JAX mirror of the PyTorch FocalLoss2d module, for checking."""
    p = jax.nn.softmax(inputs, axis=1)
    logp = jax.nn.log_softmax(inputs, axis=1)
    scored = ((1.0 - p) ** gamma) * logp                       # (N, C, H, W)
    picked = jnp.take_along_axis(scored, targets[:, None], axis=1)[:, 0]
    if weight is None:
        return -picked.mean()
    w = jnp.asarray(weight, jnp.float32)[targets]
    return -(w * picked).sum() / w.sum()


if __name__ == "__main__":
    key = jax.random.PRNGKey(0)
    k1, k2, k3, k4 = jax.random.split(key, 4)

    # Case 1: defaults (gamma=2, no class weights), auto (budget-derived) tile.
    N, C, H, W = 2, 4, 16, 16
    x = jax.random.normal(k1, (N, C, H, W), dtype=jnp.float32)
    t = jax.random.randint(k2, (N, H, W), 0, C, dtype=jnp.int32)
    out = jax.block_until_ready(focal_loss_2d(x, t, gamma=2))
    ref = jax.block_until_ready(_reference(x, t, gamma=2))
    assert jnp.allclose(out, ref, rtol=1e-5, atol=1e-5), (out, ref)

    # Case 2: class weights, forced small tile -> multiple HW blocks with a
    # ragged last tile (weighted num+den accumulation path).
    N2, C2, H2, W2 = 2, 5, 18, 18
    x2 = jax.random.normal(k3, (N2, C2, H2, W2), dtype=jnp.float32)
    t2 = jax.random.randint(k4, (N2, H2, W2), 0, C2, dtype=jnp.int32)
    wgt = jnp.array([0.5, 1.0, 2.0, 1.5, 0.25], dtype=jnp.float32)
    out2 = jax.block_until_ready(
        focal_loss_2d(x2, t2, gamma=2, weight=wgt, tile_lanes=128))
    ref2 = jax.block_until_ready(_reference(x2, t2, gamma=2, weight=wgt))
    assert jnp.allclose(out2, ref2, rtol=1e-5, atol=1e-5), (out2, ref2)

    # Case 3: N == 1 with an odd HW block count -> exercises the 2-chunk
    # per-core HW split, overlap-free boundary block and ragged tail.
    out3 = jax.block_until_ready(
        focal_loss_2d(x2[:1], t2[:1], gamma=2, weight=wgt, tile_lanes=128))
    ref3 = jax.block_until_ready(_reference(x2[:1], t2[:1], gamma=2, weight=wgt))
    assert jnp.allclose(out3, ref3, rtol=1e-5, atol=1e-5), (out3, ref3)

    # Case 4: unweighted, multi-block accumulation across the HW axis.
    out4 = jax.block_until_ready(focal_loss_2d(x, t, gamma=2, tile_lanes=128))
    ref4 = jax.block_until_ready(_reference(x, t, gamma=2))
    assert jnp.allclose(out4, ref4, rtol=1e-5, atol=1e-5), (out4, ref4)

    print("KERNEL_OK")
</pallas_src>

<mosaic_0001>
module attributes {stable_mosaic.version = 11 : i64} {
  func.func @kernel(%arg0: i32, %arg1: i32, %arg2: i32, %arg3: memref<1x4x256xf32, #tpu.memory_space<vmem>>, %arg4: memref<1x1x256xi8, #tpu.memory_space<vmem>>, %arg5: memref<1x1x256xf32, #tpu.memory_space<vmem>>) attributes {dimension_semantics = [#tpu.dimension_semantics<parallel>, #tpu.dimension_semantics<parallel>, #tpu.dimension_semantics<arbitrary>], iteration_bounds = array<i64: 2, 1, 1>, scalar_prefetch = 0 : i64, scratch_operands = 0 : i64, tpu.core_type = #tpu.core_type<tc>, window_params = [{transform_indices = @transform_0, window_bounds = array<i64: 1, 4, 256>}, {transform_indices = @transform_1, window_bounds = array<i64: 1, 1, 256>}, {transform_indices = @transform_2, window_bounds = array<i64: 1, 1, 256>}]} {
    %c0_i32 = arith.constant 0 : i32
    %0 = arith.cmpi eq, %arg2, %c0_i32 : i32
    %1 = arith.extui %0 : i1 to i32
    %c0_i32_0 = arith.constant 0 : i32
    %2 = arith.cmpi ne, %1, %c0_i32_0 : i32
    scf.if %2 {
      %cst_23 = arith.constant 0.000000e+00 : f32
      %57 = vector.broadcast %cst_23 : f32 to vector<1x1x256xf32>
      %c0_24 = arith.constant 0 : index
      %c0_25 = arith.constant 0 : index
      %c0_26 = arith.constant 0 : index
      %58 = vector.load %arg5[%c0_24, %c0_25, %c0_26] : memref<1x1x256xf32, #tpu.memory_space<vmem>>, vector<1x1x256xf32>
      tpu.vector_store %arg5[%c0_24, %c0_25, %c0_26], %57 {strides = array<i32>} : memref<1x1x256xf32, #tpu.memory_space<vmem>>, vector<1x1x256xf32>,
    } else {
    }
    %c0 = arith.constant 0 : index
    %c0_1 = arith.constant 0 : index
    %c0_2 = arith.constant 0 : index
    %3 = vector.load %arg3[%c0, %c0_1, %c0_2] : memref<1x4x256xf32, #tpu.memory_space<vmem>>, vector<1x4x256xf32>
    %4 = vector.shape_cast %3 : vector<1x4x256xf32> to vector<4x256xf32>
    %c0_3 = arith.constant 0 : index
    %c0_4 = arith.constant 0 : index
    %c0_5 = arith.constant 0 : index
    %5 = vector.load %arg4[%c0_3, %c0_4, %c0_5] : memref<1x1x256xi8, #tpu.memory_space<vmem>>, vector<1x1x256xi8>
    %6 = vector.shape_cast %5 : vector<1x1x256xi8> to vector<1x256xi8>
    %7 = arith.extsi %6 : vector<1x256xi8> to vector<1x256xi32>
    %8 = tpu.iota {dimensions = array<i32: 0>} : vector<4x256xi32>
    %9 = vector.broadcast %7 : vector<1x256xi32> to vector<4x256xi32>
    %10 = arith.cmpi eq, %8, %9 : vector<4x256xi32>
    %11 = arith.extui %10 : vector<4x256xi1> to vector<4x256xi32>
    %12 = arith.sitofp %11 : vector<4x256xi32> to vector<4x256xf32>
    %cst = arith.constant dense<0xFF800000> : vector<256xf32>
    %13 = vector.multi_reduction <maximumf>, %4, %cst [0] : vector<4x256xf32> to vector<256xf32>
    %14 = vector.shape_cast %13 : vector<256xf32> to vector<1x256xf32>
    %15 = vector.broadcast %14 : vector<1x256xf32> to vector<4x256xf32>
    %16 = arith.subf %4, %15 : vector<4x256xf32>
    %17 = math.exp %16 : vector<4x256xf32>
    %cst_6 = arith.constant dense<0.000000e+00> : vector<256xf32>
    %18 = vector.multi_reduction <add>, %17, %cst_6 [0] : vector<4x256xf32> to vector<256xf32>
    %19 = vector.shape_cast %18 : vector<256xf32> to vector<1x256xf32>
    %20 = arith.mulf %12, %4 : vector<4x256xf32>
    %cst_7 = arith.constant dense<0.000000e+00> : vector<256xf32>
    %21 = vector.multi_reduction <add>, %20, %cst_7 [0] : vector<4x256xf32> to vector<256xf32>
    %22 = vector.shape_cast %21 : vector<256xf32> to vector<1x256xf32>
    %23 = arith.mulf %12, %17 : vector<4x256xf32>
    %cst_8 = arith.constant dense<0.000000e+00> : vector<256xf32>
    %24 = vector.multi_reduction <add>, %23, %cst_8 [0] : vector<4x256xf32> to vector<256xf32>
    %25 = vector.shape_cast %24 : vector<256xf32> to vector<1x256xf32>
    %26 = arith.subf %22, %14 : vector<1x256xf32>
    %27 = math.log %19 : vector<1x256xf32>
    %28 = arith.subf %26, %27 : vector<1x256xf32>
    %29 = tpu.reciprocal %19 : vector<1x256xf32> -> vector<1x256xf32>
    %30 = arith.mulf %25, %29 : vector<1x256xf32>
    %cst_9 = arith.constant 1.000000e+00 : f32
    %31 = vector.broadcast %cst_9 : f32 to vector<1x256xf32>
    %32 = arith.subf %31, %30 : vector<1x256xf32>
    %33 = arith.mulf %32, %32 : vector<1x256xf32>
    %cst_10 = arith.constant 0.000000e+00 : f32
    %34 = vector.broadcast %cst_10 : f32 to vector<1x256xf32>
    %35 = arith.subf %34, %28 : vector<1x256xf32>
    %36 = arith.mulf %33, %35 : vector<1x256xf32>
    %c0_i32_11 = arith.constant 0 : i32
    %37 = arith.muli %arg1, %c0_i32_11 : i32
    %38 = arith.addi %37, %arg2 : i32
    %39 = tpu.iota {dimensions = array<i32: 1>} : vector<1x256xi32>
    %c256_i32 = arith.constant 256 : i32
    %40 = arith.muli %38, %c256_i32 : i32
    %41 = vector.broadcast %40 : i32 to vector<1x256xi32>
    %42 = arith.addi %41, %39 : vector<1x256xi32>
    %c256_i32_12 = arith.constant 256 : i32
    %43 = arith.muli %arg1, %c256_i32_12 : i32
    %c0_i32_13 = arith.constant 0 : i32
    %44 = arith.cmpi eq, %arg1, %c0_i32_13 : i32
    %c256_i32_14 = arith.constant 256 : i32
    %c256_i32_15 = arith.constant 256 : i32
    %45 = arith.select %44, %c256_i32_14, %c256_i32_15 : i32
    %46 = vector.broadcast %43 : i32 to vector<1x256xi32>
    %47 = arith.cmpi sge, %42, %46 : vector<1x256xi32>
    %48 = vector.broadcast %45 : i32 to vector<1x256xi32>
    %49 = arith.cmpi slt, %42, %48 : vector<1x256xi32>
    %50 = arith.andi %47, %49 : vector<1x256xi1>
    %c0_16 = arith.constant 0 : index
    %c0_17 = arith.constant 0 : index
    %c0_18 = arith.constant 0 : index
    %51 = vector.load %arg5[%c0_16, %c0_17, %c0_18] : memref<1x1x256xf32, #tpu.memory_space<vmem>>, vector<1x1x256xf32>
    %cst_19 = arith.constant 0.000000e+00 : f32
    %52 = vector.broadcast %cst_19 : f32 to vector<1x256xf32>
    %53 = arith.select %50, %36, %52 : vector<1x256xi1>, vector<1x256xf32>
    %54 = vector.shape_cast %53 : vector<1x256xf32> to vector<1x1x256xf32>
    %55 = arith.addf %51, %54 : vector<1x1x256xf32>
    %c0_20 = arith.constant 0 : index
    %c0_21 = arith.constant 0 : index
    %c0_22 = arith.constant 0 : index
    %56 = vector.load %arg5[%c0_20, %c0_21, %c0_22] : memref<1x1x256xf32, #tpu.memory_space<vmem>>, vector<1x1x256xf32>
    tpu.vector_store %arg5[%c0_20, %c0_21, %c0_22], %55 {strides = array<i32>} : memref<1x1x256xf32, #tpu.memory_space<vmem>>, vector<1x1x256xf32>,
    return
  }
  func.func @transform_0(%arg0: i32, %arg1: i32, %arg2: i32) -> (i32, i32, i32) {
    %c0_i32 = arith.constant 0 : i32
    %0 = arith.muli %arg1, %c0_i32 : i32
    %1 = arith.addi %0, %arg2 : i32
    %c0_i32_0 = arith.constant 0 : i32
    %c0_i32_1 = arith.constant 0 : i32
    return %arg0, %c0_i32_0, %1 : i32, i32, i32
  }
  func.func @transform_1(%arg0: i32, %arg1: i32, %arg2: i32) -> (i32, i32, i32) {
    %c0_i32 = arith.constant 0 : i32
    %0 = arith.muli %arg1, %c0_i32 : i32
    %1 = arith.addi %0, %arg2 : i32
    %c0_i32_0 = arith.constant 0 : i32
    %c0_i32_1 = arith.constant 0 : i32
    return %arg0, %c0_i32_0, %1 : i32, i32, i32
  }
  func.func @transform_2(%arg0: i32, %arg1: i32, %arg2: i32) -> (i32, i32, i32) {
    %c0_i32 = arith.constant 0 : i32
    %c0_i32_0 = arith.constant 0 : i32
    return %arg0, %arg1, %c0_i32 : i32, i32, i32
  }
}

</mosaic_0001>

<llo_original>
// kernel: tpu_custom_call.1
$region0: #{tpu_custom_call.1}
  #allocation0 [shape = 'u32[]', space=smem, size = 0x4, offset = 0x4, fixed_abs, tag = 'smem constant byte address 0x4 - core index']
  #allocation1 [shape = 'u32[144,128]{1,0:T(1,128)}', space=vmem, size = 0x12000, scoped, tag = 'internal scratch']
  %s0 = inlined_call_operand.hbm [shape: f32[2,4,256], index: 0, kind: input, shape index: {}]
  %s1 = inlined_call_operand.vmem [shape: s8[2,1,256], index: 1, kind: input, shape index: {}]
  %s2 = inlined_call_operand.hbm [shape: f32[2,1,256], index: 2, kind: output, shape index: {}]
  %s3 = sld [smem:[#allocation0]]
  $region49: #{tpu_custom_call.1} parent=0
    _
  %s5 = ssub.s32 1, %s3
  %s6 = scalar_select 0, %s5, %s3
  $region1: #{tpu_custom_call.1} parent=0
    #allocation2 [shape = 'u8[8192]{0}', space=vmem, size = 0x2000, scoped, tag = 'input window, operand 0']
    #allocation3 [shape = 's32[2]{0}', space=sflag, size = 0x8, scoped, tag = 'scoped memory for tpu_custom_call.1']
    #allocation4 [shape = 's32[2]{0}', space=sflag, size = 0x8, scoped, tag = 'scoped memory for tpu_custom_call.1']
    #allocation5 [shape = 'u8[2048]{0}', space=vmem, size = 0x800, scoped, tag = 'output window, operand 0']
    %7 = vsyncpa [#allocation3], 0
    %s8 = scalar_lea.sflag [#allocation3], 1
    %9 = vsyncpa %s8, 0
    %10 = vsyncpa [#allocation4], 0
    %s11 = scalar_lea.sflag [#allocation4], 1
    %12 = vsyncpa %s11, 0
    loop: start=0, step=1, limit=4
    $region2: #{tpu_custom_call.1} parent=1 // loop_pre_header
      _
    $region3: #{tpu_custom_call.1} parent=1 // loop_header
      %s14 = sphi 0, %s18
      %p15 = scmp.ge.s32.totalorder %s14, 4
      %s21 = sphi 0, %s40
      %s22 = sphi 0, %s36
      %s23 = sphi 0, %s32
      %s24 = sphi 0, %s21
      %s25 = sphi 0, %s22
      %s26 = sphi 0, %s23
      %s27 = sphi 0, %s24
      %s28 = sphi 0, %s25
      %s29 = sphi 0, %s26
      %s45 = sphi 0, %s47
      %s48 = sphi 0, %s45
      %s49 = sphi 0, %s48
      %s65 = sphi 0, %s49
      %s73 = sphi 0, %s75
      %s76 = sphi 0, %s73
      %s77 = sphi 0, %s76
      %s93 = sphi 0, %s77
      %s101 = sphi 0, %s103
      %s104 = sphi 0, %s101
      %s105 = sphi 0, %s104
      %s121 = sphi 0, %s105
    $region4: #{tpu_custom_call.1} parent=1 // loop_header_branch
      %17 = sbr.rel (%p15) target = $region8
    $region5: #{tpu_custom_call.1} parent=1 // loop_body
      %s19 = ssub.s32 %s14, 1
      %s20 = ssub.s32 %s14, 2
      %s30 = sadd.s32 1, %s23
      %p31 = scmp.ge.s32.totalorder %s30, 1
      %s32 = scalar_select %p31, 0, %s30
      %s33 = sadd.s32 1, %s22
      %s34 = scalar_select %p31, %s33, %s22
      %p35 = scmp.ge.s32.totalorder %s34, 1
      %s36 = scalar_select %p35, 0, %s34
      %s37 = sadd.s32 1, %s21
      %s38 = scalar_select %p35, %s37, %s21
      %p39 = scmp.ge.s32.totalorder %s38, 2
      %s40 = scalar_select %p39, 0, %s38
      %s41 = ssub.s32 %s21, %s40
      %s42 = ssub.s32 %s23, %s32
      %s43 = sor.u32 %s41, %s42
      %p44 = scmp.eq.s32.totalorder %s43, 0
      %s46 = sadd.s32 %s45, 1
      %s47 = scalar_select %p44, %s45, %s46
      %p50 = pneg %p44
      %p51 = scmp.eq.s32.totalorder %s14, 1
      %p52 = por %p50, %p51
      %p53 = scmp.ne.s32.totalorder %s45, %s48
      %p54 = scmp.eq.s32.totalorder %s14, 0
      %p55 = por %p53, %p54
      %p56 = scmp.ne.s32.totalorder %s45, %s48
      %p57 = scmp.eq.s32.totalorder %s19, 1
      %p58 = por %p56, %p57
      %p59 = scmp.ne.s32.totalorder %s48, %s49
      %p60 = scmp.eq.s32.totalorder %s19, 0
      %p61 = por %p59, %p60
      %p62 = scmp.ne.s32.totalorder %s48, %s49
      %p63 = scmp.eq.s32.totalorder %s20, 1
      %p64 = por %p62, %p63
      %p66 = scmp.ne.s32.totalorder %s49, %s65
      %p67 = scmp.eq.s32.totalorder %s20, 0
      %p68 = por %p66, %p67
      %s69 = ssub.s32 %s21, %s40
      %s70 = ssub.s32 %s23, %s32
      %s71 = sor.u32 %s69, %s70
      %p72 = scmp.eq.s32.totalorder %s71, 0
      %s74 = sadd.s32 %s73, 1
      %s75 = scalar_select %p72, %s73, %s74
      %p78 = pneg %p72
      %p79 = scmp.eq.s32.totalorder %s14, 1
      %p80 = por %p78, %p79
      %p81 = scmp.ne.s32.totalorder %s73, %s76
      %p82 = scmp.eq.s32.totalorder %s14, 0
      %p83 = por %p81, %p82
      %p84 = scmp.ne.s32.totalorder %s73, %s76
      %p85 = scmp.eq.s32.totalorder %s19, 1
      %p86 = por %p84, %p85
      %p87 = scmp.ne.s32.totalorder %s76, %s77
      %p88 = scmp.eq.s32.totalorder %s19, 0
      %p89 = por %p87, %p88
      %p90 = scmp.ne.s32.totalorder %s76, %s77
      %p91 = scmp.eq.s32.totalorder %s20, 1
      %p92 = por %p90, %p91
      %p94 = scmp.ne.s32.totalorder %s77, %s93
      %p95 = scmp.eq.s32.totalorder %s20, 0
      %p96 = por %p94, %p95
      %s97 = ssub.s32 %s21, %s40
      %s98 = ssub.s32 %s22, %s36
      %s99 = sor.u32 %s97, %s98
      %p100 = scmp.eq.s32.totalorder %s99, 0
      %s102 = sadd.s32 %s101, 1
      %s103 = scalar_select %p100, %s101, %s102
      %p106 = pneg %p100
      %p107 = scmp.eq.s32.totalorder %s14, 1
      %p108 = por %p106, %p107
      %p109 = scmp.ne.s32.totalorder %s101, %s104
      %p110 = scmp.eq.s32.totalorder %s14, 0
      %p111 = por %p109, %p110
      %p112 = scmp.ne.s32.totalorder %s101, %s104
      %p113 = scmp.eq.s32.totalorder %s19, 1
      %p114 = por %p112, %p113
      %p115 = scmp.ne.s32.totalorder %s104, %s105
      %p116 = scmp.eq.s32.totalorder %s19, 0
      %p117 = por %p115, %p116
      %p118 = scmp.ne.s32.totalorder %s104, %s105
      %p119 = scmp.eq.s32.totalorder %s20, 1
      %p120 = por %p118, %p119
      %p122 = scmp.ne.s32.totalorder %s105, %s121
      %p123 = scmp.eq.s32.totalorder %s20, 0
      %p124 = por %p122, %p123
      %p125 = scmp.le.s32.totalorder 1, %s14
      %p126 = scmp.lt.s32.totalorder %s14, 3
      %p127 = pnand %p125, %p126
      %p128 = pneg %p127
      // Predicated region
      $region9: #{tpu_custom_call.1} parent=5 // pred_check
        _
      $region10: #{tpu_custom_call.1} parent=5 // pred_check_branch
        %130 = sbr.rel (%p127) target = $region12
      $region11: #{tpu_custom_call.1} parent=5 // pred_region
        %s131 = ssub.s32 %s14, 1
      $region12: #{tpu_custom_call.1} parent=5 // pred_fallthru
        _
      %p132 = scmp.lt.s32.totalorder %s14, 2
      // Predicated region
      $region13: #{tpu_custom_call.1} parent=5 // pred_check
        %p133 = pneg %p132
      $region14: #{tpu_custom_call.1} parent=5 // pred_check_branch
        %135 = sbr.rel (%p133) target = $region16
      $region15: #{tpu_custom_call.1} parent=5 // pred_region
        // Predicated region
        $region17: #{tpu_custom_call.1} parent=15 // pred_check
          %p136 = pneg %p55
        $region18: #{tpu_custom_call.1} parent=15 // pred_check_branch
          %138 = sbr.rel (%p136) target = $region20
        $region19: #{tpu_custom_call.1} parent=15 // pred_region
          %s139 = sand.u32 %s45, 1
          %s140 = scalar_lea.sflag [#allocation3], %s139
          %s141 = sand.u32 %s45, 1
          %s142 = smul.addr %s141, 8
          %s143 = scalar_lea.vmem [#allocation2], %s142
          %s144 = smul.u32 2, %s23
          %s146 = ssub.s32 128, 128
          %147 = vsyncadd %s140, %s146
          %s148 = smul.addr %s21, 2
          %s149 = sadd.s32 %s144, %s148
          %s150 = smul.addr %s149, 64
          %s151 = scalar_lea.hbm %s0, %s150
          %s153 = sshll.u32 %s143, 4
          %s154 = int_to_ptr.vmem [resolvable:$true] %s153
          %156 = dma.hbm_to_vmem [thread:$0]  %s151, 128, %s154, %s140
        $region20: #{tpu_custom_call.1} parent=15 // pred_fallthru
          _
        // Predicated region
        $region21: #{tpu_custom_call.1} parent=15 // pred_check
          %p157 = pneg %p83
        $region22: #{tpu_custom_call.1} parent=15 // pred_check_branch
          %159 = sbr.rel (%p157) target = $region24
        $region23: #{tpu_custom_call.1} parent=15 // pred_region
          %s160 = smul.u32 2, %s23
          %p161 = scmp.lt.s32.totalorder %s21, 1
          %s162 = scalar_select %p161, %s21, 1
          %p163 = scmp.lt.s32.totalorder %s160, 1
          %s164 = scalar_select %p163, %s160, 1
          %s165 = smul.addr %s162, 2
          %s166 = sadd.s32 %s164, %s165
          %s167 = scalar_lea.vmem %s1, %s166
          %s168 = smul.u32 2, %s23
        $region24: #{tpu_custom_call.1} parent=15 // pred_fallthru
          _
      $region16: #{tpu_custom_call.1} parent=5 // pred_fallthru
        _
      %p169 = scmp.le.s32.totalorder 1, %s14
      %p170 = scmp.lt.s32.totalorder %s14, 3
      %p171 = pnand %p169, %p170
      %p172 = pneg %p171
      // Predicated region
      $region25: #{tpu_custom_call.1} parent=5 // pred_check
        _
      $region26: #{tpu_custom_call.1} parent=5 // pred_check_branch
        %174 = sbr.rel (%p171) target = $region28
      $region27: #{tpu_custom_call.1} parent=5 // pred_region
        %s175 = ssub.s32 %s14, 1
        %s176 = sand.u32 %s48, 1
        %s177 = scalar_lea.sflag [#allocation3], %s176
        %s178 = sand.u32 %s48, 1
        %s179 = smul.addr %s178, 8
        %s180 = scalar_lea.vmem [#allocation2], %s179
        // Predicated region
        $region29: #{tpu_custom_call.1} parent=27 // pred_check
          %p181 = pneg %p61
        $region30: #{tpu_custom_call.1} parent=27 // pred_check_branch
          %183 = sbr.rel (%p181) target = $region32
        $region31: #{tpu_custom_call.1} parent=27 // pred_region
          %184 = dma.done %s177, 128
        $region32: #{tpu_custom_call.1} parent=27 // pred_fallthru
          _
        %s185 = sand.u32 %s48, 1
        %s186 = scalar_lea.sflag [#allocation3], %s185
        %s187 = sand.u32 %s48, 1
        %s188 = smul.addr %s187, 8
        %s189 = scalar_lea.vmem [#allocation2], %s188
        %p190 = pneg %p61
        %p191 = pneg %p58
        %s192 = smul.u32 2, %s26
        %p193 = scmp.lt.s32.totalorder %s24, 1
        %s194 = scalar_select %p193, %s24, 1
        %p195 = scmp.lt.s32.totalorder %s192, 1
        %s196 = scalar_select %p195, %s192, 1
        %s197 = smul.addr %s194, 2
        %s198 = sadd.s32 %s196, %s197
        %s199 = scalar_lea.vmem %s1, %s198
        %p200 = pneg %p89
        %p201 = pneg %p86
        %p202 = pneg %p117
        %p203 = pneg %p114
        %s204 = sand.u32 %s104, 1
        %s205 = scalar_lea.sflag [#allocation4], %s204
        %s206 = sand.u32 %s104, 1
        %s207 = smul.addr %s206, 2
        %s208 = scalar_lea.vmem [#allocation5], %s207
        %s209 = smul.u32 2, %s26
        %s210 = smul.u32 2, %s26
        %p211 = scmp.lt.s32.totalorder %s24, 1
        %s212 = scalar_select %p211, %s24, 1
        %p213 = scmp.lt.s32.totalorder %s210, 1
        %s214 = scalar_select %p213, %s210, 1
        %s215 = smul.addr %s212, 2
        %s216 = sadd.s32 %s214, %s215
        %s217 = scalar_lea.vmem %s1, %s216
        %s218 = smul.u32 2, %s26
        %p219 = scmp.eq.s32.totalorder %s26, 0
        // Predicated region
        $region33: #{tpu_custom_call.1} parent=27 // pred_check
          %p220 = pneg %p219
        $region34: #{tpu_custom_call.1} parent=27 // pred_check_branch
          %222 = sbr.rel (%p220) target = $region36
        $region35: #{tpu_custom_call.1} parent=27 // pred_region
          %v223 = vlaneseq
          %vm224 = vcmp.ge.s32.totalorder %v223, 0
          %vm225 = vcmp.lt.s32.totalorder %v223, 256
          %vm226 = vmand %vm224, %vm225
          %227 = vst.msk [vmem:[%s208] sm:$0x3] %vm226, 0.0
        $region36: #{tpu_custom_call.1} parent=27 // pred_fallthru
          _
        %v228 = vld [vmem:[%s180] sm:$0xff]
        %v229 = vld [vmem:[%s217] sm:$0x3]
        %v230 = vunpack.c.0.s8 %v229
        %v231 = vlaneseq
        %v232 = vshrl.u32 %v231, 7
        %v233 = vlaneseq
        %v234 = vshrl.u32 %v233, 7
        %v235 = vsub.s32 0, %v234
        %v236 = vrot.slane %v230, %v235
        %v237 = vlaneseq
        %v238 = vshrl.u32 %v237, 7
        %v239 = vsub.s32 4, %v238
        %v240 = vrot.slane %v230, %v239
        %v241 = vlaneseq
        %v242 = vshrl.u32 %v241, 7
        %v243 = vsub.s32 0, %v242
        %v244 = vrot.slane %v236, %v243
        %v245 = vlaneseq
        %v246 = vshrl.u32 %v245, 7
        %v247 = vsub.s32 0, %v246
        %v248 = vrot.slane %v240, %v247
        %vm249 = vcmp.eq.s32.totalorder %v232, %v244
        %vm250 = vcmp.eq.s32.totalorder %v232, %v248
        %v251 = vsel %vm249, 1, 0
        %v252 = vsel %vm250, 1, 0
        %v253 = vcvt.s32.f32 %v251
        %v254 = vcvt.s32.f32 %v252
        %v256 = vcombine.high %v228, %v228
        %vm258 = vcmask 1043456
        %v259 = vsel %vm258, %v228, -inf
        %v260 = vrot.slane %v259, 4
        %v261 = vmax.f32 %v259, %v260
        %v262 = vrot.slane %v261, 2
        %v263 = vmax.f32 %v261, %v262
        %v264 = vrot.slane %v263, 1
        %v265 = vmax.f32 %v263, %v264
        %v266 = vsel %vm258, %v256, -inf
        %v267 = vrot.slane %v266, 4
        %v268 = vmax.f32 %v266, %v267
        %v269 = vrot.slane %v268, 2
        %v270 = vmax.f32 %v268, %v269
        %v271 = vrot.slane %v270, 1
        %v272 = vmax.f32 %v270, %v271
        %v275 = vcombine.low %v265, %v272
        %v277 = vsub.f32 %v228, %v275
        %v278 = vmul.f32 %v277, 1.442695
        %v279 = vpow.pop %v278
        %v281 = vcombine.high %v279, %v279
        %v283 = vsel %vm258, %v279, 0.0
        %v284 = vrot.slane %v283, 4
        %v285 = vadd.f32 %v283, %v284
        %v286 = vrot.slane %v285, 2
        %v287 = vadd.f32 %v285, %v286
        %v288 = vrot.slane %v287, 1
        %v289 = vadd.f32 %v287, %v288
        %v290 = vsel %vm258, %v281, 0.0
        %v291 = vrot.slane %v290, 4
        %v292 = vadd.f32 %v290, %v291
        %v293 = vrot.slane %v292, 2
        %v294 = vadd.f32 %v292, %v293
        %v295 = vrot.slane %v294, 1
        %v296 = vadd.f32 %v294, %v295
        %v297 = vmul.f32 %v253, %v228
        %v298 = vmul.f32 %v254, %v256
        %v299 = vsel %vm258, %v297, 0.0
        %v300 = vrot.slane %v299, 4
        %v301 = vadd.f32 %v299, %v300
        %v302 = vrot.slane %v301, 2
        %v303 = vadd.f32 %v301, %v302
        %v304 = vrot.slane %v303, 1
        %v305 = vadd.f32 %v303, %v304
        %v306 = vsel %vm258, %v298, 0.0
        %v307 = vrot.slane %v306, 4
        %v308 = vadd.f32 %v306, %v307
        %v309 = vrot.slane %v308, 2
        %v310 = vadd.f32 %v308, %v309
        %v311 = vrot.slane %v310, 1
        %v312 = vadd.f32 %v310, %v311
        %v313 = vmul.f32 %v253, %v279
        %v314 = vmul.f32 %v254, %v281
        %v315 = vsel %vm258, %v313, 0.0
        %v316 = vrot.slane %v315, 4
        %v317 = vadd.f32 %v315, %v316
        %v318 = vrot.slane %v317, 2
        %v319 = vadd.f32 %v317, %v318
        %v320 = vrot.slane %v319, 1
        %v321 = vadd.f32 %v319, %v320
        %v322 = vsel %vm258, %v314, 0.0
        %v323 = vrot.slane %v322, 4
        %v324 = vadd.f32 %v322, %v323
        %v325 = vrot.slane %v324, 2
        %v326 = vadd.f32 %v324, %v325
        %v327 = vrot.slane %v326, 1
        %v328 = vadd.f32 %v326, %v327
        %v329 = vsub.f32 %v305, %v265
        %v330 = vsub.f32 %v312, %v272
        %v331 = vlog2.pop %v289
        %v332 = vmul.f32 %v331, 0.6931472
        %v333 = vlog2.pop %v296
        %v334 = vmul.f32 %v333, 0.6931472
        %v335 = vsub.f32 %v329, %v332
        %v336 = vsub.f32 %v330, %v334
        %v337 = vrcp.pop %v289
        %v338 = vrcp.pop %v296
        %v339 = vmul.f32 %v321, %v337
        %v340 = vmul.f32 %v328, %v338
        %v341 = vsub.f32 1.0, %v339
        %v342 = vsub.f32 1.0, %v340
        %v343 = vmul.f32 %v341, %v341
        %v344 = vmul.f32 %v342, %v342
        %v345 = vsub.f32 0.0, %v335
        %v346 = vsub.f32 0.0, %v336
        %v347 = vmul.f32 %v343, %v345
        %v348 = vmul.f32 %v344, %v346
        %v349 = vlaneseq
        %v350 = vand.u32 %v349, 127
        %v351 = vadd.s32 %v350, 128
        %s352 = smul.u32 %s26, 256
        %v353 = vstv %s352
        %v354 = vadd.s32 %v353, %v350
        %v355 = vadd.s32 %v353, %v351
        %s356 = smul.u32 %s25, 256
        %v357 = vstv %s356
        %vm358 = vcmp.ge.s32.totalorder %v354, %v357
        %vm359 = vcmp.ge.s32.totalorder %v355, %v357
        %vm360 = vcmp.lt.s32.totalorder %v354, 256
        %vm361 = vcmp.lt.s32.totalorder %v355, 256
        %vm362 = vmand %vm358, %vm360
        %vm363 = vmand %vm359, %vm361
        %v364 = vld [vmem:[%s208] sm:$0x3]
        %v365 = vsel %vm362, %v347, 0.0
        %v366 = vsel %vm363, %v348, 0.0
        %v369 = vcombine.low %v365, %v366
        %v371 = vunpack.c.l.s4 1966171168
        %v372 = vunpack.c.0.s8 %v371
        %v373 = vlaneseq
        %v374 = vshrl.u32 %v373, 7
        %v375 = vsub.s32 %v372, %v374
        %v376 = vrot.slane %v369, %v375
        %v378 = vunpack.c.l.s4 1966171168
        %v379 = vunpack.c.0.s8 %v378
        %v380 = vlaneseq
        %v381 = vshrl.u32 %v380, 7
        %v382 = vsub.s32 %v379, %v381
        %v383 = vrot.slane %v376, %v382
        %v385 = vadd.f32 %v364, %v383
        %v386 = vlaneseq
        %vm387 = vcmp.ge.s32.totalorder %v386, 0
        %vm388 = vcmp.lt.s32.totalorder %v386, 256
        %vm389 = vmand %vm387, %vm388
        %390 = vst.msk [vmem:[%s208] sm:$0x3] %vm389, %v385
        %s391 = sand.u32 %s104, 1
        %s392 = scalar_lea.sflag [#allocation4], %s391
        %s393 = sand.u32 %s104, 1
        %s394 = smul.addr %s393, 2
        %s395 = scalar_lea.vmem [#allocation5], %s394
        // Predicated region
        $region37: #{tpu_custom_call.1} parent=27 // pred_check
          %p396 = pneg %p114
        $region38: #{tpu_custom_call.1} parent=27 // pred_check_branch
          %398 = sbr.rel (%p396) target = $region40
        $region39: #{tpu_custom_call.1} parent=27 // pred_region
          %s400 = ssub.s32 32, 32
          %401 = vsyncadd %s392, %s400
          %s402 = smul.addr %s25, 2
          %s403 = smul.addr %s24, 2
          %s404 = sadd.s32 %s402, %s403
          %s405 = smul.addr %s404, 16
          %s406 = scalar_lea.hbm %s2, %s405
          %s408 = sshll.u32 %s395, 4
          %s409 = int_to_ptr.vmem [resolvable:$true] %s408
          %411 = dma.vmem_to_hbm [thread:$0]  %s409, 32, %s406, %s392
        $region40: #{tpu_custom_call.1} parent=27 // pred_fallthru
          _
      $region28: #{tpu_custom_call.1} parent=5 // pred_fallthru
        _
      %p412 = scmp.le.s32.totalorder 2, %s14
      // Predicated region
      $region41: #{tpu_custom_call.1} parent=5 // pred_check
        %p413 = pneg %p412
      $region42: #{tpu_custom_call.1} parent=5 // pred_check_branch
        %415 = sbr.rel (%p413) target = $region44
      $region43: #{tpu_custom_call.1} parent=5 // pred_region
        %s416 = ssub.s32 %s14, 2
        // Predicated region
        $region45: #{tpu_custom_call.1} parent=43 // pred_check
          %p417 = pneg %p120
        $region46: #{tpu_custom_call.1} parent=43 // pred_check_branch
          %419 = sbr.rel (%p417) target = $region48
        $region47: #{tpu_custom_call.1} parent=43 // pred_region
          %s420 = sand.u32 %s105, 1
          %s421 = scalar_lea.sflag [#allocation4], %s420
          %s422 = sand.u32 %s105, 1
          %s423 = smul.addr %s422, 2
          %s424 = scalar_lea.vmem [#allocation5], %s423
          %425 = dma.done %s421, 32
        $region48: #{tpu_custom_call.1} parent=43 // pred_fallthru
          _
      $region44: #{tpu_custom_call.1} parent=5 // pred_fallthru
        _
    $region6: #{tpu_custom_call.1} parent=1 // loop_footer
      %s18 = sadd.s32 1, %s14
    $region7: #{tpu_custom_call.1} parent=1 // loop_footer_branch
      %13 = sbr.rel target = $region3
    $region8: #{tpu_custom_call.1} parent=1 // loop_exit
      _
    %426 = vsyncpa [#allocation3], 1
    %s427 = scalar_lea.sflag [#allocation3], 1
    %428 = vsyncpa %s427, 1
    %429 = vsyncpa [#allocation4], 1
    %s430 = scalar_lea.sflag [#allocation4], 1
    %431 = vsyncpa %s430, 1

</llo_original>
